<compile_context>
chip_gen: v7x
topology: tpu7x:2x2x1
jax: 0.10.0
libtpu: 0.0.40
codegen_flags: <defaults>
</compile_context>

<pallas_src>
import functools
import math

import jax
import jax.numpy as jnp
from jax.experimental import pallas as pl
from jax.experimental.pallas import tpu as pltpu


def _cdiv(a, b):
    return -(-a // b)


def _round_up(n, m):
    return ((n + m - 1) // m) * m


def _fourier_kernel(x_ref, bs_ref, bias_ref, o_ref):
    # One wide MXU matmul for every (scale, sin/cos) column block, then a single
    # lane-dense sin + full-width store.  cos(p) == sin(p + pi/2) via the bias.
    proj = jnp.dot(x_ref[...], bs_ref[...], preferred_element_type=jnp.float32)
    o_ref[...] = jnp.sin(proj + bias_ref[...])


def make_multi_scale_fourier_encoder(B, scales, *, block_m=1024):
    """Returns apply(x) == MultiScaleFourierEncoder(input_dim, scales, out_dim).forward.

    B      : (input_dim, out_dim) float32 projection matrix (the nn.Parameter).
    scales : static sequence of python floats.
    """
    scales = tuple(float(s) for s in scales)
    K, N = B.shape
    S = len(scales)
    F = 2 * S * N

    # One-time weight preprocessing (hoisted out of the forward):
    # pack [s*B, s*B] per scale (sin block, cos block) and a matching bias row
    # of [0, pi/2] so the kernel needs exactly one sin over the packed slab,
    # already in torch.cat([sin(p0), cos(p0), sin(p1), cos(p1), ...]) order.
    Bf = B.astype(jnp.float32)
    half_pi = float(math.pi / 2.0)
    w_blocks, b_blocks = [], []
    for s in scales:
        sb = Bf * s
        w_blocks.append(sb)                                  # sin block
        w_blocks.append(sb)                                  # cos block
        b_blocks.append(jnp.zeros((1, N), jnp.float32))      # sin -> +0
        b_blocks.append(jnp.full((1, N), half_pi, jnp.float32))  # cos -> +pi/2
    Bs = jnp.concatenate(w_blocks, axis=1)      # (K, F)
    bias = jnp.concatenate(b_blocks, axis=1)    # (1, F)

    @jax.jit
    def apply(x):
        if x.ndim != 2 or x.shape[1] != K:
            raise ValueError(f"expected x of shape (batch, {K}), got {x.shape}")
        M = x.shape[0]
        xf = x.astype(jnp.float32)

        # Row tile: multiple of 8 sublanes, capped so the grid has >= 2 steps
        # whenever M > 8 (keeps both v7x TensorCores busy on small batches).
        tm = min(block_m, _round_up(_cdiv(M, 2), 8))
        grid = (_cdiv(M, tm),)

        cost = pl.CostEstimate(
            flops=2 * M * K * F,
            transcendentals=M * F,
            bytes_accessed=(M * K + M * F + K * F + F) * 4,
        )

        return pl.pallas_call(
            _fourier_kernel,
            grid=grid,
            in_specs=[
                pl.BlockSpec((tm, K), lambda i: (i, 0)),   # activations, pipelined
                pl.BlockSpec((K, F), lambda i: (0, 0)),    # packed weights, resident
                pl.BlockSpec((1, F), lambda i: (0, 0)),    # sin/cos phase bias, resident
            ],
            out_specs=pl.BlockSpec((tm, F), lambda i: (i, 0)),  # lane-dense output slab
            out_shape=jax.ShapeDtypeStruct((M, F), jnp.float32),
            compiler_params=pltpu.CompilerParams(
                dimension_semantics=("parallel",),  # rows split across TCs on v7x
            ),
            cost_estimate=cost,
        )(xf, Bs, bias)

    return apply


def _reference(x, B, scales):
    # Pure-JAX mirror of the torch forward.
    feats = []
    for s in scales:
        proj = (x * float(s)) @ B
        feats.append(jnp.sin(proj))
        feats.append(jnp.cos(proj))
    return jnp.concatenate(feats, axis=1)


if __name__ == "__main__":
    key = jax.random.PRNGKey(0)
    k_b, k_x = jax.random.split(key)

    input_dim, out_dim = 32, 16
    scales = (1.0, 2.0, 4.0, 8.0)   # powers of two -> folding them into B is exact
    batch = 64

    # Round values to the bf16 grid (and scale by a power of two) so the matmul
    # products are exact under any MXU f32 decomposition; keeps the check tight.
    B = jax.random.normal(k_b, (input_dim, out_dim), jnp.float32)
    B = B.astype(jnp.bfloat16).astype(jnp.float32)
    x = jax.random.normal(k_x, (batch, input_dim), jnp.float32)
    x = x.astype(jnp.bfloat16).astype(jnp.float32) * 0.125

    encode = make_multi_scale_fourier_encoder(B, scales)

    # Main check: even batch (grid of 2, no edge block).
    out = jax.block_until_ready(encode(x))
    ref = _reference(x, B, scales)
    assert out.shape == (batch, 2 * len(scales) * out_dim), out.shape
    err = float(jnp.max(jnp.abs(out - ref)))
    assert err < 1e-3, f"max abs error {err}"

    # Ragged check: exercises the cdiv-grid partial edge block (no host pad/slice).
    x_ragged = x[:50]
    out_r = jax.block_until_ready(encode(x_ragged))
    ref_r = _reference(x_ragged, B, scales)
    assert out_r.shape == (50, 2 * len(scales) * out_dim), out_r.shape
    err_r = float(jnp.max(jnp.abs(out_r - ref_r)))
    assert err_r < 1e-3, f"ragged max abs error {err_r}"

    print("KERNEL_OK")
</pallas_src>

<mosaic_0001>
module attributes {stable_mosaic.version = 11 : i64} {
  func.func @_fourier_kernel(%arg0: i32, %arg1: memref<32x32xf32, #tpu.memory_space<vmem>>, %arg2: memref<32x128xf32, #tpu.memory_space<vmem>>, %arg3: memref<1x128xf32, #tpu.memory_space<vmem>>, %arg4: memref<32x128xf32, #tpu.memory_space<vmem>>) attributes {dimension_semantics = [#tpu.dimension_semantics<parallel>], iteration_bounds = array<i64: 2>, scalar_prefetch = 0 : i64, scratch_operands = 0 : i64, tpu.core_type = #tpu.core_type<tc>, window_params = [{transform_indices = @transform_0, window_bounds = array<i64: 32, 32>}, {pipeline_mode = #tpu.pipeline_mode<synchronous>, transform_indices = @transform_1, window_bounds = array<i64: 32, 128>}, {pipeline_mode = #tpu.pipeline_mode<synchronous>, transform_indices = @transform_2, window_bounds = array<i64: 1, 128>}, {transform_indices = @transform_3, window_bounds = array<i64: 32, 128>}]} {
    %c0 = arith.constant 0 : index
    %c0_0 = arith.constant 0 : index
    %0 = vector.load %arg1[%c0, %c0_0] : memref<32x32xf32, #tpu.memory_space<vmem>>, vector<32x32xf32>
    %c0_1 = arith.constant 0 : index
    %c0_2 = arith.constant 0 : index
    %1 = vector.load %arg2[%c0_1, %c0_2] : memref<32x128xf32, #tpu.memory_space<vmem>>, vector<32x128xf32>
    %cst = arith.constant dense<0.000000e+00> : vector<32x128xf32>
    %2 = tpu.matmul %0, %1, %cst {dimension_numbers = #tpu.dot_dimension_numbers<[1], [0], [0], [1], [0, 0, 1, 1], [], []>} : vector<32x32xf32>, vector<32x128xf32>, vector<32x128xf32> -> vector<32x128xf32>
    %c0_3 = arith.constant 0 : index
    %c0_4 = arith.constant 0 : index
    %3 = vector.load %arg3[%c0_3, %c0_4] : memref<1x128xf32, #tpu.memory_space<vmem>>, vector<1x128xf32>
    %4 = vector.broadcast %3 : vector<1x128xf32> to vector<32x128xf32>
    %5 = arith.addf %2, %4 : vector<32x128xf32>
    %6 = math.sin %5 : vector<32x128xf32>
    %c0_5 = arith.constant 0 : index
    %c0_6 = arith.constant 0 : index
    %7 = vector.load %arg4[%c0_5, %c0_6] : memref<32x128xf32, #tpu.memory_space<vmem>>, vector<32x128xf32>
    tpu.vector_store %arg4[%c0_5, %c0_6], %6 {strides = array<i32>} : memref<32x128xf32, #tpu.memory_space<vmem>>, vector<32x128xf32>,
    return
  }
  func.func @transform_0(%arg0: i32) -> (i32, i32) {
    %c0_i32 = arith.constant 0 : i32
    %c0_i32_0 = arith.constant 0 : i32
    return %arg0, %c0_i32 : i32, i32
  }
  func.func @transform_1(%arg0: i32) -> (i32, i32) {
    %c0_i32 = arith.constant 0 : i32
    %c0_i32_0 = arith.constant 0 : i32
    %c0_i32_1 = arith.constant 0 : i32
    return %c0_i32, %c0_i32_0 : i32, i32
  }
  func.func @transform_2(%arg0: i32) -> (i32, i32) {
    %c0_i32 = arith.constant 0 : i32
    %c0_i32_0 = arith.constant 0 : i32
    %c0_i32_1 = arith.constant 0 : i32
    return %c0_i32, %c0_i32_0 : i32, i32
  }
  func.func @transform_3(%arg0: i32) -> (i32, i32) {
    %c0_i32 = arith.constant 0 : i32
    %c0_i32_0 = arith.constant 0 : i32
    return %arg0, %c0_i32 : i32, i32
  }
}

</mosaic_0001>

<llo_original>
// kernel: apply.1
$region0: #{apply.1}
  #allocation0 [shape = 'u32[]', space=smem, size = 0x4, offset = 0x4, fixed_abs, tag = 'smem constant byte address 0x4 - core index']
  #allocation1 [shape = 'u32[144,128]{1,0:T(1,128)}', space=vmem, size = 0x12000, scoped, tag = 'internal scratch']
  %s0 = inlined_call_operand.vmem [shape: f32[64,32], index: 0, kind: input, shape index: {}]
  %s1 = inlined_call_operand.vmem [shape: f32[32,128], index: 1, kind: input, shape index: {}]
  %s2 = inlined_call_operand.vmem [shape: f32[1,128], index: 2, kind: input, shape index: {}]
  %s3 = inlined_call_operand.hbm [shape: f32[64,128], index: 3, kind: output, shape index: {}]
  %s4 = sld [smem:[#allocation0]]
  $region45: #{apply.1} parent=0
    _
  %s6 = ssub.s32 1, %s4
  %s7 = scalar_select 0, %s6, %s4
  $region1: #{apply.1} parent=0
    #allocation2 [shape = 'u8[32768]{0}', space=vmem, size = 0x8000, scoped, tag = 'output window, operand 0']
    #allocation3 [shape = 's32[2]{0}', space=sflag, size = 0x8, scoped, tag = 'scoped memory for apply.1']
    %8 = vsyncpa [#allocation3], 0
    %s9 = scalar_lea.sflag [#allocation3], 1
    %10 = vsyncpa %s9, 0
    loop: start=0, step=1, limit=4
    $region2: #{apply.1} parent=1 // loop_pre_header
      _
    $region3: #{apply.1} parent=1 // loop_header
      %s12 = sphi 0, %s16
      %p13 = scmp.ge.s32.totalorder %s12, 4
      %s22 = sphi 0, %s24
      %s25 = sphi 0, %s22
      %s26 = sphi 0, %s25
      %s42 = sphi 0, %s26
      %s46 = sphi 0, %s46
      %s48 = sphi 0, %s46
      %s49 = sphi 0, %s48
      %s63 = sphi 0, %s49
      %s67 = sphi 0, %s67
      %s69 = sphi 0, %s67
      %s70 = sphi 0, %s69
      %s84 = sphi 0, %s70
      %s90 = sphi 0, %s92
      %s93 = sphi 0, %s90
      %s94 = sphi 0, %s93
      %s110 = sphi 0, %s94
    $region4: #{apply.1} parent=1 // loop_header_branch
      %15 = sbr.rel (%p13) target = $region8
    $region5: #{apply.1} parent=1 // loop_body
      %s17 = ssub.s32 %s12, 1
      %s18 = ssub.s32 %s12, 2
      %s19 = sadd.s32 %s12, 1
      %s20 = ssub.s32 %s12, %s19
      %p21 = scmp.eq.s32.totalorder %s20, 0
      %s23 = sadd.s32 %s22, 1
      %s24 = scalar_select %p21, %s22, %s23
      %p27 = pneg %p21
      %p28 = scmp.eq.s32.totalorder %s12, 1
      %p29 = por %p27, %p28
      %p30 = scmp.ne.s32.totalorder %s22, %s25
      %p31 = scmp.eq.s32.totalorder %s12, 0
      %p32 = por %p30, %p31
      %p33 = scmp.ne.s32.totalorder %s22, %s25
      %p34 = scmp.eq.s32.totalorder %s17, 1
      %p35 = por %p33, %p34
      %p36 = scmp.ne.s32.totalorder %s25, %s26
      %p37 = scmp.eq.s32.totalorder %s17, 0
      %p38 = por %p36, %p37
      %p39 = scmp.ne.s32.totalorder %s25, %s26
      %p40 = scmp.eq.s32.totalorder %s18, 1
      %p41 = por %p39, %p40
      %p43 = scmp.ne.s32.totalorder %s26, %s42
      %p44 = scmp.eq.s32.totalorder %s18, 0
      %p45 = por %p43, %p44
      %s47 = sadd.s32 %s46, 1
      %p50 = scmp.eq.s32.totalorder %s12, 1
      %p51 = scmp.ne.s32.totalorder %s46, %s48
      %p52 = scmp.eq.s32.totalorder %s12, 0
      %p53 = por %p51, %p52
      %p54 = scmp.ne.s32.totalorder %s46, %s48
      %p55 = scmp.eq.s32.totalorder %s17, 1
      %p56 = por %p54, %p55
      %p57 = scmp.ne.s32.totalorder %s48, %s49
      %p58 = scmp.eq.s32.totalorder %s17, 0
      %p59 = por %p57, %p58
      %p60 = scmp.ne.s32.totalorder %s48, %s49
      %p61 = scmp.eq.s32.totalorder %s18, 1
      %p62 = por %p60, %p61
      %p64 = scmp.ne.s32.totalorder %s49, %s63
      %p65 = scmp.eq.s32.totalorder %s18, 0
      %p66 = por %p64, %p65
      %s68 = sadd.s32 %s67, 1
      %p71 = scmp.eq.s32.totalorder %s12, 1
      %p72 = scmp.ne.s32.totalorder %s67, %s69
      %p73 = scmp.eq.s32.totalorder %s12, 0
      %p74 = por %p72, %p73
      %p75 = scmp.ne.s32.totalorder %s67, %s69
      %p76 = scmp.eq.s32.totalorder %s17, 1
      %p77 = por %p75, %p76
      %p78 = scmp.ne.s32.totalorder %s69, %s70
      %p79 = scmp.eq.s32.totalorder %s17, 0
      %p80 = por %p78, %p79
      %p81 = scmp.ne.s32.totalorder %s69, %s70
      %p82 = scmp.eq.s32.totalorder %s18, 1
      %p83 = por %p81, %p82
      %p85 = scmp.ne.s32.totalorder %s70, %s84
      %p86 = scmp.eq.s32.totalorder %s18, 0
      %p87 = por %p85, %p86
      %s88 = ssub.s32 %s12, %s19
      %p89 = scmp.eq.s32.totalorder %s88, 0
      %s91 = sadd.s32 %s90, 1
      %s92 = scalar_select %p89, %s90, %s91
      %p95 = pneg %p89
      %p96 = scmp.eq.s32.totalorder %s12, 1
      %p97 = por %p95, %p96
      %p98 = scmp.ne.s32.totalorder %s90, %s93
      %p99 = scmp.eq.s32.totalorder %s12, 0
      %p100 = por %p98, %p99
      %p101 = scmp.ne.s32.totalorder %s90, %s93
      %p102 = scmp.eq.s32.totalorder %s17, 1
      %p103 = por %p101, %p102
      %p104 = scmp.ne.s32.totalorder %s93, %s94
      %p105 = scmp.eq.s32.totalorder %s17, 0
      %p106 = por %p104, %p105
      %p107 = scmp.ne.s32.totalorder %s93, %s94
      %p108 = scmp.eq.s32.totalorder %s18, 1
      %p109 = por %p107, %p108
      %p111 = scmp.ne.s32.totalorder %s94, %s110
      %p112 = scmp.eq.s32.totalorder %s18, 0
      %p113 = por %p111, %p112
      %p114 = scmp.le.s32.totalorder 1, %s12
      %p115 = scmp.lt.s32.totalorder %s12, 3
      %p116 = pnand %p114, %p115
      %p117 = pneg %p116
      // Predicated region
      $region9: #{apply.1} parent=5 // pred_check
        _
      $region10: #{apply.1} parent=5 // pred_check_branch
        %119 = sbr.rel (%p116) target = $region12
      $region11: #{apply.1} parent=5 // pred_region
        %s120 = ssub.s32 %s12, 1
        // Predicated region
        $region13: #{apply.1} parent=11 // pred_check
          %p121 = pneg %p59
        $region14: #{apply.1} parent=11 // pred_check_branch
          %123 = sbr.rel (%p121) target = $region16
        $region15: #{apply.1} parent=11 // pred_region
          _
        $region16: #{apply.1} parent=11 // pred_fallthru
          _
        // Predicated region
        $region17: #{apply.1} parent=11 // pred_check
          %p124 = pneg %p80
        $region18: #{apply.1} parent=11 // pred_check_branch
          %126 = sbr.rel (%p124) target = $region20
        $region19: #{apply.1} parent=11 // pred_region
          _
        $region20: #{apply.1} parent=11 // pred_fallthru
          _
      $region12: #{apply.1} parent=5 // pred_fallthru
        _
      %p127 = scmp.lt.s32.totalorder %s12, 2
      // Predicated region
      $region21: #{apply.1} parent=5 // pred_check
        %p128 = pneg %p127
      $region22: #{apply.1} parent=5 // pred_check_branch
        %130 = sbr.rel (%p128) target = $region24
      $region23: #{apply.1} parent=5 // pred_region
        // Predicated region
        $region25: #{apply.1} parent=23 // pred_check
          %p131 = pneg %p32
        $region26: #{apply.1} parent=23 // pred_check_branch
          %133 = sbr.rel (%p131) target = $region28
        $region27: #{apply.1} parent=23 // pred_region
          %s134 = smul.u32 4, %s12
          %p135 = scmp.lt.s32.totalorder %s134, 7
          %s136 = scalar_select %p135, %s134, 7
          %s137 = smul.addr %s136, 8
          %s138 = scalar_lea.vmem %s0, %s137
          %s139 = smul.u32 4, %s12
        $region28: #{apply.1} parent=23 // pred_fallthru
          _
      $region24: #{apply.1} parent=5 // pred_fallthru
        _
      %p140 = scmp.le.s32.totalorder 1, %s12
      %p141 = scmp.lt.s32.totalorder %s12, 3
      %p142 = pnand %p140, %p141
      %p143 = pneg %p142
      // Predicated region
      $region29: #{apply.1} parent=5 // pred_check
        _
      $region30: #{apply.1} parent=5 // pred_check_branch
        %145 = sbr.rel (%p142) target = $region32
      $region31: #{apply.1} parent=5 // pred_region
        %s146 = ssub.s32 %s12, 1
        %s147 = smul.u32 4, %s17
        %p148 = scmp.lt.s32.totalorder %s147, 7
        %s149 = scalar_select %p148, %s147, 7
        %s150 = smul.addr %s149, 8
        %s151 = scalar_lea.vmem %s0, %s150
        %p152 = pneg %p38
        %p153 = pneg %p35
        %p154 = pneg %p59
        %p155 = pneg %p56
        %p156 = pneg %p80
        %p157 = pneg %p77
        %p158 = pneg %p106
        %p159 = pneg %p103
        %s160 = sand.u32 %s93, 1
        %s161 = scalar_lea.sflag [#allocation3], %s160
        %s162 = sand.u32 %s93, 1
        %s163 = smul.addr %s162, 32
        %s164 = scalar_lea.vmem [#allocation2], %s163
        %s165 = smul.u32 4, %s17
        %p166 = scmp.lt.s32.totalorder %s165, 7
        %s167 = scalar_select %p166, %s165, 7
        %s168 = smul.addr %s167, 8
        %s169 = scalar_lea.vmem %s0, %s168
        %s170 = smul.u32 4, %s17
        %s171 = smul.u32 4, %s17
        %v172 = vld [vmem:[%s169] sm:$0xff]
        %v173 = vld [vmem:[%s169 + $0x8] sm:$0xff]
        %v174 = vld [vmem:[%s169 + $0x10] sm:$0xff]
        %v175 = vld [vmem:[%s169 + $0x18] sm:$0xff]
        %v176 = vld [vmem:[%s1] sm:$0xff]
        %v177 = vld [vmem:[%s1 + $0x8] sm:$0xff]
        %v178 = vld [vmem:[%s1 + $0x10] sm:$0xff]
        %v179 = vld [vmem:[%s1 + $0x18] sm:$0xff]
        %v180 = vld [vmem:[%s2] sm:$0x1]
        %v182 = vlaneseq
        %v183 = vshrl.u32 %v182, 7
        %v184 = vsub.s32 0, %v183
        %v185 = vrot.slane %v180, %v184
        %vm187 = vcmask 261120
        %v189 = vsel %vm187, %v172, 0
        %v192 = vsel %vm187, %v173, 0
        %v195 = vsel %vm187, %v174, 0
        %v198 = vsel %vm187, %v175, 0
        %200 = vmatprep.subr.mxu0 0.0
        %201 = vmatpush1.msra.mxu0 %v176
        %202 = vmatprep.subr.mxu0 0.0
        %203 = vmatpush1.msra.mxu0 %v177
        %204 = vmatprep.subr.mxu0 0.0
        %205 = vmatpush1.msra.mxu0 %v178
        %206 = vmatprep.subr.mxu0 0.0
        %207 = vmatpush1.msra.mxu0 %v179
        %208 = vmatprep.subr.mxu0 0.0
        %209 = vmatpush1.msra.mxu0 0.0
        %210 = vmatprep.subr.mxu0 0.0
        %211 = vmatpush1.msra.mxu0 0.0
        %212 = vmatprep.subr.mxu0 0.0
        %213 = vmatpush1.msra.mxu0 0.0
        %214 = vmatprep.subr.mxu0 0.0
        %215 = vmatpush1.msra.mxu0 0.0
        %216 = vmatprep.subr.mxu0 0.0
        %217 = vmatpush1.msra.mxu0 0.0
        %218 = vmatprep.subr.mxu0 0.0
        %219 = vmatpush1.msra.mxu0 0.0
        %220 = vmatprep.subr.mxu0 0.0
        %221 = vmatpush1.msra.mxu0 0.0
        %222 = vmatprep.subr.mxu0 0.0
        %223 = vmatpush1.msra.mxu0 0.0
        %224 = vmatprep.subr.mxu0 0.0
        %225 = vmatpush1.msra.mxu0 0.0
        %226 = vmatprep.subr.mxu0 0.0
        %227 = vmatpush1.msra.mxu0 0.0
        %228 = vmatprep.subr.mxu0 0.0
        %229 = vmatpush1.msra.mxu0 0.0
        %230 = vmatprep.subr.mxu0 0.0
        %231 = vmatpush1.msra.mxu0 0.0
        %232 = vmatprep.subr.mxu0 0.0
        %233 = vmatpush1.msra.mxu0 0.0
        %234 = vmatprep.subr.mxu0 0.0
        %235 = vmatpush1.msra.mxu0 0.0
        %236 = vmatprep.subr.mxu0 0.0
        %237 = vmatpush1.msra.mxu0 0.0
        %238 = vmatprep.subr.mxu0 0.0
        %239 = vmatpush1.msra.mxu0 0.0
        %240 = vmatprep.subr.mxu0 0.0
        %241 = vmatpush1.msra.mxu0 0.0
        %242 = vmatprep.subr.mxu0 0.0
        %243 = vmatpush1.msra.mxu0 0.0
        %244 = vmatprep.subr.mxu0 0.0
        %245 = vmatpush1.msra.mxu0 0.0
        %246 = vmatprep.subr.mxu0 0.0
        %247 = vmatpush1.msra.mxu0 0.0
        %248 = vmatprep.subr.mxu0 0.0
        %249 = vmatpush1.msra.mxu0 0.0
        %250 = vmatprep.subr.mxu0 0.0
        %251 = vmatpush1.msra.mxu0 0.0
        %252 = vmatprep.subr.mxu0 0.0
        %253 = vmatpush1.msra.mxu0 0.0
        %254 = vmatprep.subr.mxu0 0.0
        %255 = vmatpush1.msra.mxu0 0.0
        %256 = vmatprep.subr.mxu0 0.0
        %257 = vmatpush1.msra.mxu0 0.0
        %258 = vmatprep.subr.mxu0 0.0
        %259 = vmatpush1.msra.mxu0 0.0
        %260 = vmatprep.subr.mxu0 0.0
        %261 = vmatpush1.msra.mxu0 0.0
        %262 = vmatprep.subr.mxu0 0.0
        %263 = vmatpush1.msra.mxu0 0.0
        %264 = vmatprep.mubr.f32.mxu0 0.0
        %265 = vmatmul.mubr.f32.gmra.mrb[0].mxu0 %v189
        %v266 = vpop.f32.mrb[0].mxu0
        %v267 = vadd.f32 %v185, %v266
        %v268 = vpop.f32.mrb[0].mxu0
        %269 = vmatprep.mubr.f32.mxu0 0.0
        %270 = vmatmul.mubr.f32.gmra.mrb[0].mxu0 %v192
        %v271 = vpop.f32.mrb[0].mxu0
        %v272 = vadd.f32 %v185, %v271
        %v273 = vpop.f32.mrb[0].mxu0
        %274 = vmatprep.mubr.f32.mxu0 0.0
        %275 = vmatmul.mubr.f32.gmra.mrb[0].mxu0 %v195
        %v276 = vpop.f32.mrb[0].mxu0
        %v277 = vadd.f32 %v185, %v276
        %v278 = vpop.f32.mrb[0].mxu0
        %279 = vmatprep.mubr.f32.mxu0 0.0
        %280 = vmatmul.mubr.f32.gmra.mrb[0].mxu0 %v198
        %v281 = vpop.f32.mrb[0].mxu0
        %v282 = vadd.f32 %v185, %v281
        %v283 = vpop.f32.mrb[0].mxu0
        %284 = vdwg.mxu0
        %v285 = vand.u32 2147483647, %v267
        %vm286 = vcmp.le.f32.partialorder %v285, 0.7853982
        %vm287 = vcmp.lt.s32.totalorder %v267, 0
        %v288 = vand.u32 %v267, 2139095040
        %v289 = vshrl.u32 %v288, 23
        %v290 = vsub.s32 %v289, 127
        %v291 = vand.u32 2147483647, %v267
        %v292 = vand.u32 %v291, 8388607
        %v293 = vor.u32 %v292, 8388608
        %v294 = vsub.s32 0, %v293
        %v295 = vadd.s32 %v290, 1
        %vm296 = vcmp.gt.s32.totalorder %v295, 0
        %v297 = vsel %vm296, %v295, 0
        %v298 = vshrl.u32 %v297, 5
        %v299 = vand.u32 %v297, 31
        %v300 = vsub.s32 32, %v299
        %v301 = vshrl.u32 683565275, %v300
        %v302 = vshll.u32 683565275, %v299
        %v303 = vshrl.u32 2475754826, %v300
        %v304 = vor.u32 %v302, %v303
        %v305 = vshll.u32 2475754826, %v299
        %v306 = vshrl.u32 2131351028, %v300
        %v307 = vor.u32 %v305, %v306
        %v308 = vshll.u32 2131351028, %v299
        %v309 = vshrl.u32 2102212464, %v300
        %v310 = vor.u32 %v308, %v309
        %v311 = vshll.u32 2102212464, %v299
        %v312 = vshrl.u32 920167782, %v300
        %v313 = vor.u32 %v311, %v312
        %v314 = vshll.u32 920167782, %v299
        %v315 = vshrl.u32 1326507024, %v300
        %v316 = vor.u32 %v314, %v315
        %vm317 = vcmp.lt.s32.totalorder %v298, 1
        %vm318 = vcmp.lt.s32.totalorder %v298, 2
        %vm319 = vcmp.lt.s32.totalorder %v298, 3
        %vm320 = vcmp.lt.s32.totalorder %v298, 4
        %v321 = vsel %vm317, %v301, %v304
        %v322 = vsel %vm320, %v310, 2102212464
        %v323 = vsel %vm319, %v307, %v322
        %v324 = vsel %vm318, %v321, %v323
        %v325 = vsel %vm317, %v304, %v307
        %v326 = vsel %vm320, %v313, 920167782
        %v327 = vsel %vm319, %v310, %v326
        %v328 = vsel %vm318, %v325, %v327
        %v329 = vsel %vm317, %v307, %v310
        %v330 = vsel %vm320, %v316, 1326507024
        %v331 = vsel %vm319, %v313, %v330
        %v332 = vsel %vm318, %v329, %v331
        %v333 = vshll.u32 %v293, 8
        %v334 = vmul.u32.u64.compose %v333, %v332
        %v335 = vextract.low.u32 %v334
        %v336 = vextract.high.u32 %v334
        %v337 = vmul.u32.u64.compose %v333, %v328
        %v338 = vextract.low.u32 %v337
        %v339 = vextract.high.u32 %v337
        %v340 = vmul.u32 %v333, %v324
        %v341 = vadd.s32 %v336, %v338
        %vm342 = vc.u32 %v336, %v338
        %v343 = vadd.s32 %v339, 1
        %v344 = vsel %vm342, %v343, %v339
        %v345 = vadd.s32 %v340, %v344
        %v346 = vadd.s32 %v345, 536870912
        %v347 = vshrl.u32 %v346, 30
        %v348 = vshll.u32 %v347, 30
        %v349 = vsub.s32 %v345, %v348
        %vm350 = vcmp.lt.s32.totalorder %v349, 0
        %v351 = vsub.s32 0, %v349
        %v352 = vsel %vm350, %v351, %v349
        %v353 = vclz %v352
        %v354 = vsub.s32 %v353, 2
        %vm355 = vcmp.gt.s32.totalorder 0, %v354
        %v356 = vsel %vm355, 0, %v354
        %v357 = vsub.s32 32, %v356
        %v358 = vshll.u32 %v349, %v356
        %v359 = vshrl.u32 %v341, %v357
        %v360 = vor.u32 %v358, %v359
        %v361 = vsub.s32 4294967266, %v356
        %v362 = vadd.s32 %v361, 127
        %v363 = vshll.u32 %v362, 23
        %v364 = vor.u32 4788187, %v363
        %v365 = vand.u32 2147483647, %v364
        %v367 = vcvt.s32.f32 %v360
        %v368 = vmul.f32 %v367, %v365
        %v369 = vxor.u32 %v368, 2147483648
        %v370 = vsel %vm287, %v369, %v368
        %v371 = vsub.s32 4, %v347
        %v372 = vsel %vm287, %v371, %v347
        %v373 = vsel %vm286, %v267, %v370
        %v374 = vsel %vm286, 0, %v372
        %v375 = vcosq.f32.pop %v373
        %v376 = vsinq.f32.pop %v373
        %vm377 = vweird.f32 %v267
        %v378 = vadd.s32 %v374, 3
        %v379 = vand.u32 %v378, 3
        %vm380 = vcmp.lt.s32.totalorder %v379, 2
        %vm381 = vcmp.eq.s32.totalorder %v379, 0
        %v382 = vxor.u32 %v376, 2147483648
        %v383 = vsel %vm381, %v375, %v382
        %vm384 = vcmp.eq.s32.totalorder %v379, 2
        %v385 = vxor.u32 %v375, 2147483648
        %v386 = vsel %vm384, %v385, %v376
        %v387 = vsel %vm380, %v383, %v386
        %v388 = vsel %vm377, nan, %v387
        %v389 = vand.u32 2147483647, %v272
        %vm390 = vcmp.le.f32.partialorder %v389, 0.7853982
        %vm391 = vcmp.lt.s32.totalorder %v272, 0
        %v392 = vand.u32 %v272, 2139095040
        %v393 = vshrl.u32 %v392, 23
        %v394 = vsub.s32 %v393, 127
        %v395 = vand.u32 2147483647, %v272
        %v396 = vand.u32 %v395, 8388607
        %v397 = vor.u32 %v396, 8388608
        %v398 = vsub.s32 0, %v397
        %v399 = vadd.s32 %v394, 1
        %vm400 = vcmp.gt.s32.totalorder %v399, 0
        %v401 = vsel %vm400, %v399, 0
        %v402 = vshrl.u32 %v401, 5
        %v403 = vand.u32 %v401, 31
        %v404 = vsub.s32 32, %v403
        %v405 = vshrl.u32 683565275, %v404
        %v406 = vshll.u32 683565275, %v403
        %v407 = vshrl.u32 2475754826, %v404
        %v408 = vor.u32 %v406, %v407
        %v409 = vshll.u32 2475754826, %v403
        %v410 = vshrl.u32 2131351028, %v404
        %v411 = vor.u32 %v409, %v410
        %v412 = vshll.u32 2131351028, %v403
        %v413 = vshrl.u32 2102212464, %v404
        %v414 = vor.u32 %v412, %v413
        %v415 = vshll.u32 2102212464, %v403
        %v416 = vshrl.u32 920167782, %v404
        %v417 = vor.u32 %v415, %v416
        %v418 = vshll.u32 920167782, %v403
        %v419 = vshrl.u32 1326507024, %v404
        %v420 = vor.u32 %v418, %v419
        %vm421 = vcmp.lt.s32.totalorder %v402, 1
        %vm422 = vcmp.lt.s32.totalorder %v402, 2
        %vm423 = vcmp.lt.s32.totalorder %v402, 3
        %vm424 = vcmp.lt.s32.totalorder %v402, 4
        %v425 = vsel %vm421, %v405, %v408
        %v426 = vsel %vm424, %v414, 2102212464
        %v427 = vsel %vm423, %v411, %v426
        %v428 = vsel %vm422, %v425, %v427
        %v429 = vsel %vm421, %v408, %v411
        %v430 = vsel %vm424, %v417, 920167782
        %v431 = vsel %vm423, %v414, %v430
        %v432 = vsel %vm422, %v429, %v431
        %v433 = vsel %vm421, %v411, %v414
        %v434 = vsel %vm424, %v420, 1326507024
        %v435 = vsel %vm423, %v417, %v434
        %v436 = vsel %vm422, %v433, %v435
        %v437 = vshll.u32 %v397, 8
        %v438 = vmul.u32.u64.compose %v437, %v436
        %v439 = vextract.low.u32 %v438
        %v440 = vextract.high.u32 %v438
        %v441 = vmul.u32.u64.compose %v437, %v432
        %v442 = vextract.low.u32 %v441
        %v443 = vextract.high.u32 %v441
        %v444 = vmul.u32 %v437, %v428
        %v445 = vadd.s32 %v440, %v442
        %vm446 = vc.u32 %v440, %v442
        %v447 = vadd.s32 %v443, 1
        %v448 = vsel %vm446, %v447, %v443
        %v449 = vadd.s32 %v444, %v448
        %v450 = vadd.s32 %v449, 536870912
        %v451 = vshrl.u32 %v450, 30
        %v452 = vshll.u32 %v451, 30
        %v453 = vsub.s32 %v449, %v452
        %vm454 = vcmp.lt.s32.totalorder %v453, 0
        %v455 = vsub.s32 0, %v453
        %v456 = vsel %vm454, %v455, %v453
        %v457 = vclz %v456
        %v458 = vsub.s32 %v457, 2
        %vm459 = vcmp.gt.s32.totalorder 0, %v458
        %v460 = vsel %vm459, 0, %v458
        %v461 = vsub.s32 32, %v460
        %v462 = vshll.u32 %v453, %v460
        %v463 = vshrl.u32 %v445, %v461
        %v464 = vor.u32 %v462, %v463
        %v465 = vsub.s32 4294967266, %v460
        %v466 = vadd.s32 %v465, 127
        %v467 = vshll.u32 %v466, 23
        %v468 = vor.u32 4788187, %v467
        %v469 = vand.u32 2147483647, %v468
        %v471 = vcvt.s32.f32 %v464
        %v472 = vmul.f32 %v471, %v469
        %v473 = vxor.u32 %v472, 2147483648
        %v474 = vsel %vm391, %v473, %v472
        %v475 = vsub.s32 4, %v451
        %v476 = vsel %vm391, %v475, %v451
        %v477 = vsel %vm390, %v272, %v474
        %v478 = vsel %vm390, 0, %v476
        %v479 = vcosq.f32.pop %v477
        %v480 = vsinq.f32.pop %v477
        %vm481 = vweird.f32 %v272
        %v482 = vadd.s32 %v478, 3
        %v483 = vand.u32 %v482, 3
        %vm484 = vcmp.lt.s32.totalorder %v483, 2
        %vm485 = vcmp.eq.s32.totalorder %v483, 0
        %v486 = vxor.u32 %v480, 2147483648
        %v487 = vsel %vm485, %v479, %v486
        %vm488 = vcmp.eq.s32.totalorder %v483, 2
        %v489 = vxor.u32 %v479, 2147483648
        %v490 = vsel %vm488, %v489, %v480
        %v491 = vsel %vm484, %v487, %v490
        %v492 = vsel %vm481, nan, %v491
        %v493 = vand.u32 2147483647, %v277
        %vm494 = vcmp.le.f32.partialorder %v493, 0.7853982
        %vm495 = vcmp.lt.s32.totalorder %v277, 0
        %v496 = vand.u32 %v277, 2139095040
        %v497 = vshrl.u32 %v496, 23
        %v498 = vsub.s32 %v497, 127
        %v499 = vand.u32 2147483647, %v277
        %v500 = vand.u32 %v499, 8388607
        %v501 = vor.u32 %v500, 8388608
        %v502 = vsub.s32 0, %v501
        %v503 = vadd.s32 %v498, 1
        %vm504 = vcmp.gt.s32.totalorder %v503, 0
        %v505 = vsel %vm504, %v503, 0
        %v506 = vshrl.u32 %v505, 5
        %v507 = vand.u32 %v505, 31
        %v508 = vsub.s32 32, %v507
        %v509 = vshrl.u32 683565275, %v508
        %v510 = vshll.u32 683565275, %v507
        %v511 = vshrl.u32 2475754826, %v508
        %v512 = vor.u32 %v510, %v511
        %v513 = vshll.u32 2475754826, %v507
        %v514 = vshrl.u32 2131351028, %v508
        %v515 = vor.u32 %v513, %v514
        %v516 = vshll.u32 2131351028, %v507
        %v517 = vshrl.u32 2102212464, %v508
        %v518 = vor.u32 %v516, %v517
        %v519 = vshll.u32 2102212464, %v507
        %v520 = vshrl.u32 920167782, %v508
        %v521 = vor.u32 %v519, %v520
        %v522 = vshll.u32 920167782, %v507
        %v523 = vshrl.u32 1326507024, %v508
        %v524 = vor.u32 %v522, %v523
        %vm525 = vcmp.lt.s32.totalorder %v506, 1
        %vm526 = vcmp.lt.s32.totalorder %v506, 2
        %vm527 = vcmp.lt.s32.totalorder %v506, 3
        %vm528 = vcmp.lt.s32.totalorder %v506, 4
        %v529 = vsel %vm525, %v509, %v512
        %v530 = vsel %vm528, %v518, 2102212464
        %v531 = vsel %vm527, %v515, %v530
        %v532 = vsel %vm526, %v529, %v531
        %v533 = vsel %vm525, %v512, %v515
        %v534 = vsel %vm528, %v521, 920167782
        %v535 = vsel %vm527, %v518, %v534
        %v536 = vsel %vm526, %v533, %v535
        %v537 = vsel %vm525, %v515, %v518
        %v538 = vsel %vm528, %v524, 1326507024
        %v539 = vsel %vm527, %v521, %v538
        %v540 = vsel %vm526, %v537, %v539
        %v541 = vshll.u32 %v501, 8
        %v542 = vmul.u32.u64.compose %v541, %v540
        %v543 = vextract.low.u32 %v542
        %v544 = vextract.high.u32 %v542
        %v545 = vmul.u32.u64.compose %v541, %v536
        %v546 = vextract.low.u32 %v545
        %v547 = vextract.high.u32 %v545
        %v548 = vmul.u32 %v541, %v532
        %v549 = vadd.s32 %v544, %v546
        %vm550 = vc.u32 %v544, %v546
        %v551 = vadd.s32 %v547, 1
        %v552 = vsel %vm550, %v551, %v547
        %v553 = vadd.s32 %v548, %v552
        %v554 = vadd.s32 %v553, 536870912
        %v555 = vshrl.u32 %v554, 30
        %v556 = vshll.u32 %v555, 30
        %v557 = vsub.s32 %v553, %v556
        %vm558 = vcmp.lt.s32.totalorder %v557, 0
        %v559 = vsub.s32 0, %v557
        %v560 = vsel %vm558, %v559, %v557
        %v561 = vclz %v560
        %v562 = vsub.s32 %v561, 2
        %vm563 = vcmp.gt.s32.totalorder 0, %v562
        %v564 = vsel %vm563, 0, %v562
        %v565 = vsub.s32 32, %v564
        %v566 = vshll.u32 %v557, %v564
        %v567 = vshrl.u32 %v549, %v565
        %v568 = vor.u32 %v566, %v567
        %v569 = vsub.s32 4294967266, %v564
        %v570 = vadd.s32 %v569, 127
        %v571 = vshll.u32 %v570, 23
        %v572 = vor.u32 4788187, %v571
        %v573 = vand.u32 2147483647, %v572
        %v575 = vcvt.s32.f32 %v568
        %v576 = vmul.f32 %v575, %v573
        %v577 = vxor.u32 %v576, 2147483648
        %v578 = vsel %vm495, %v577, %v576
        %v579 = vsub.s32 4, %v555
        %v580 = vsel %vm495, %v579, %v555
        %v581 = vsel %vm494, %v277, %v578
        %v582 = vsel %vm494, 0, %v580
        %v583 = vcosq.f32.pop %v581
        %v584 = vsinq.f32.pop %v581
        %vm585 = vweird.f32 %v277
        %v586 = vadd.s32 %v582, 3
        %v587 = vand.u32 %v586, 3
        %vm588 = vcmp.lt.s32.totalorder %v587, 2
        %vm589 = vcmp.eq.s32.totalorder %v587, 0
        %v590 = vxor.u32 %v584, 2147483648
        %v591 = vsel %vm589, %v583, %v590
        %vm592 = vcmp.eq.s32.totalorder %v587, 2
        %v593 = vxor.u32 %v583, 2147483648
        %v594 = vsel %vm592, %v593, %v584
        %v595 = vsel %vm588, %v591, %v594
        %v596 = vsel %vm585, nan, %v595
        %v597 = vand.u32 2147483647, %v282
        %vm598 = vcmp.le.f32.partialorder %v597, 0.7853982
        %vm599 = vcmp.lt.s32.totalorder %v282, 0
        %v600 = vand.u32 %v282, 2139095040
        %v601 = vshrl.u32 %v600, 23
        %v602 = vsub.s32 %v601, 127
        %v603 = vand.u32 2147483647, %v282
        %v604 = vand.u32 %v603, 8388607
        %v605 = vor.u32 %v604, 8388608
        %v606 = vsub.s32 0, %v605
        %v607 = vadd.s32 %v602, 1
        %vm608 = vcmp.gt.s32.totalorder %v607, 0
        %v609 = vsel %vm608, %v607, 0
        %v610 = vshrl.u32 %v609, 5
        %v611 = vand.u32 %v609, 31
        %v612 = vsub.s32 32, %v611
        %v613 = vshrl.u32 683565275, %v612
        %v614 = vshll.u32 683565275, %v611
        %v615 = vshrl.u32 2475754826, %v612
        %v616 = vor.u32 %v614, %v615
        %v617 = vshll.u32 2475754826, %v611
        %v618 = vshrl.u32 2131351028, %v612
        %v619 = vor.u32 %v617, %v618
        %v620 = vshll.u32 2131351028, %v611
        %v621 = vshrl.u32 2102212464, %v612
        %v622 = vor.u32 %v620, %v621
        %v623 = vshll.u32 2102212464, %v611
        %v624 = vshrl.u32 920167782, %v612
        %v625 = vor.u32 %v623, %v624
        %v626 = vshll.u32 920167782, %v611
        %v627 = vshrl.u32 1326507024, %v612
        %v628 = vor.u32 %v626, %v627
        %vm629 = vcmp.lt.s32.totalorder %v610, 1
        %vm630 = vcmp.lt.s32.totalorder %v610, 2
        %vm631 = vcmp.lt.s32.totalorder %v610, 3
        %vm632 = vcmp.lt.s32.totalorder %v610, 4
        %v633 = vsel %vm629, %v613, %v616
        %v634 = vsel %vm632, %v622, 2102212464
        %v635 = vsel %vm631, %v619, %v634
        %v636 = vsel %vm630, %v633, %v635
        %v637 = vsel %vm629, %v616, %v619
        %v638 = vsel %vm632, %v625, 920167782
        %v639 = vsel %vm631, %v622, %v638
        %v640 = vsel %vm630, %v637, %v639
        %v641 = vsel %vm629, %v619, %v622
        %v642 = vsel %vm632, %v628, 1326507024
        %v643 = vsel %vm631, %v625, %v642
        %v644 = vsel %vm630, %v641, %v643
        %v645 = vshll.u32 %v605, 8
        %v646 = vmul.u32.u64.compose %v645, %v644
        %v647 = vextract.low.u32 %v646
        %v648 = vextract.high.u32 %v646
        %v649 = vmul.u32.u64.compose %v645, %v640
        %v650 = vextract.low.u32 %v649
        %v651 = vextract.high.u32 %v649
        %v652 = vmul.u32 %v645, %v636
        %v653 = vadd.s32 %v648, %v650
        %vm654 = vc.u32 %v648, %v650
        %v655 = vadd.s32 %v651, 1
        %v656 = vsel %vm654, %v655, %v651
        %v657 = vadd.s32 %v652, %v656
        %v658 = vadd.s32 %v657, 536870912
        %v659 = vshrl.u32 %v658, 30
        %v660 = vshll.u32 %v659, 30
        %v661 = vsub.s32 %v657, %v660
        %vm662 = vcmp.lt.s32.totalorder %v661, 0
        %v663 = vsub.s32 0, %v661
        %v664 = vsel %vm662, %v663, %v661
        %v665 = vclz %v664
        %v666 = vsub.s32 %v665, 2
        %vm667 = vcmp.gt.s32.totalorder 0, %v666
        %v668 = vsel %vm667, 0, %v666
        %v669 = vsub.s32 32, %v668
        %v670 = vshll.u32 %v661, %v668
        %v671 = vshrl.u32 %v653, %v669
        %v672 = vor.u32 %v670, %v671
        %v673 = vsub.s32 4294967266, %v668
        %v674 = vadd.s32 %v673, 127
        %v675 = vshll.u32 %v674, 23
        %v676 = vor.u32 4788187, %v675
        %v677 = vand.u32 2147483647, %v676
        %v679 = vcvt.s32.f32 %v672
        %v680 = vmul.f32 %v679, %v677
        %v681 = vxor.u32 %v680, 2147483648
        %v682 = vsel %vm599, %v681, %v680
        %v683 = vsub.s32 4, %v659
        %v684 = vsel %vm599, %v683, %v659
        %v685 = vsel %vm598, %v282, %v682
        %v686 = vsel %vm598, 0, %v684
        %v687 = vcosq.f32.pop %v685
        %v688 = vsinq.f32.pop %v685
        %vm689 = vweird.f32 %v282
        %v690 = vadd.s32 %v686, 3
        %v691 = vand.u32 %v690, 3
        %vm692 = vcmp.lt.s32.totalorder %v691, 2
        %vm693 = vcmp.eq.s32.totalorder %v691, 0
        %v694 = vxor.u32 %v688, 2147483648
        %v695 = vsel %vm693, %v687, %v694
        %vm696 = vcmp.eq.s32.totalorder %v691, 2
        %v697 = vxor.u32 %v687, 2147483648
        %v698 = vsel %vm696, %v697, %v688
        %v699 = vsel %vm692, %v695, %v698
        %v700 = vsel %vm689, nan, %v699
        %701 = vst [vmem:[%s164] sm:$0xff] %v388
        %702 = vst [vmem:[%s164 + $0x8] sm:$0xff] %v492
        %703 = vst [vmem:[%s164 + $0x10] sm:$0xff] %v596
        %704 = vst [vmem:[%s164 + $0x18] sm:$0xff] %v700
        %s705 = sand.u32 %s93, 1
        %s706 = scalar_lea.sflag [#allocation3], %s705
        %s707 = sand.u32 %s93, 1
        %s708 = smul.addr %s707, 32
        %s709 = scalar_lea.vmem [#allocation2], %s708
        // Predicated region
        $region33: #{apply.1} parent=31 // pred_check
          %p710 = pneg %p103
        $region34: #{apply.1} parent=31 // pred_check_branch
          %712 = sbr.rel (%p710) target = $region36
        $region35: #{apply.1} parent=31 // pred_region
          %s713 = smul.u32 4, %s17
          %s715 = ssub.s32 512, 512
          %716 = vsyncadd %s706, %s715
          %s717 = smul.addr %s713, 128
          %s718 = scalar_lea.hbm %s3, %s717
          %s719 = sshll.u32 %s709, 4
          %s720 = int_to_ptr.vmem [resolvable:$true] %s719
          %725 = dma.vmem_to_hbm [thread:$0]  %s720, 512, %s718, %s706, 128, 128, 8
        $region36: #{apply.1} parent=31 // pred_fallthru
          _
      $region32: #{apply.1} parent=5 // pred_fallthru
        _
      %p726 = scmp.le.s32.totalorder 2, %s12
      // Predicated region
      $region37: #{apply.1} parent=5 // pred_check
        %p727 = pneg %p726
      $region38: #{apply.1} parent=5 // pred_check_branch
        %729 = sbr.rel (%p727) target = $region40
      $region39: #{apply.1} parent=5 // pred_region
        %s730 = ssub.s32 %s12, 2
        // Predicated region
        $region41: #{apply.1} parent=39 // pred_check
          %p731 = pneg %p109
        $region42: #{apply.1} parent=39 // pred_check_branch
          %733 = sbr.rel (%p731) target = $region44
        $region43: #{apply.1} parent=39 // pred_region
          %s734 = sand.u32 %s94, 1
          %s735 = scalar_lea.sflag [#allocation3], %s734
          %s736 = sand.u32 %s94, 1
          %s737 = smul.addr %s736, 32
          %s738 = scalar_lea.vmem [#allocation2], %s737
          %739 = dma.done %s735, 512
        $region44: #{apply.1} parent=39 // pred_fallthru
          _
      $region40: #{apply.1} parent=5 // pred_fallthru
        _
    $region6: #{apply.1} parent=1 // loop_footer
      %s16 = sadd.s32 1, %s12
    $region7: #{apply.1} parent=1 // loop_footer_branch
      %11 = sbr.rel target = $region3
    $region8: #{apply.1} parent=1 // loop_exit
      _
    %740 = vsyncpa [#allocation3], 1
    %s741 = scalar_lea.sflag [#allocation3], 1
    %742 = vsyncpa %s741, 1

</llo_original>
